<compile_context>
chip_gen: v5e
topology: v5e:2x2
jax: 0.10.0
libtpu: 0.0.40
codegen_flags: <defaults>
</compile_context>

<pallas_src>
import jax
import jax.numpy as jnp
from jax.experimental import pallas as pl
from jax.experimental.pallas import tpu as pltpu


# --------------------------------------------------------------------------- #
# Kernel                                                                      #
# --------------------------------------------------------------------------- #
def highway_kernel(xb_ref, w_ref, xres_ref, gamma_ref, beta_ref, o_ref):
    eps = jnp.float32(1e-5)

    # One fused matmul for the paired linear/gate column tile.
    # bf16 operands, f32 accumulation on the MXU.  Linear biases are omitted:
    # a per-feature constant is cancelled exactly by train-mode BN mean subtraction.
    h = jnp.dot(xb_ref[...], w_ref[...],
                preferred_element_type=jnp.float32)            # [B, 2*tn] f32

    # Training-mode BatchNorm1d over the batch axis.  Per-feature statistics,
    # so tiling the feature axis does not change them.  Centered variance.
    mean = jnp.mean(h, axis=0, keepdims=True)                  # [1, 2*tn]
    c = h - mean
    var = jnp.mean(c * c, axis=0, keepdims=True)
    inv = jax.lax.rsqrt(var + eps)

    tn = h.shape[1] // 2                                       # static, 128-aligned
    gamma = gamma_ref[...]                                      # [1, tn]
    beta = beta_ref[...]                                        # [1, tn]

    hn_lin = c[:, :tn] * inv[:, :tn] * gamma + beta
    hn_gate = c[:, tn:] * inv[:, tn:] * gamma + beta

    act = jnp.maximum(hn_lin, 0.0)                              # ReLU(BN(Linear(x)))
    gate = jax.nn.sigmoid(hn_gate)                              # sigmoid(BN(Gate(x)))
    x = xres_ref[...]                                           # [B, tn] f32 residual

    o_ref[...] = (gate * act + (1.0 - gate) * x).astype(o_ref.dtype)


# --------------------------------------------------------------------------- #
# Parameter preparation (run ONCE, hoisted out of the per-call path)          #
# --------------------------------------------------------------------------- #
def prepare_highway_params(w_lin, w_gate, gamma, beta, *, tn=None):
    """Pad to lane-dense feature width, pair lin/gate columns per N-tile, cast bf16."""
    D = w_lin.shape[0]
    dp = ((D + 127) // 128) * 128
    pad = dp - D
    if tn is None:
        tn = next(t for t in (512, 256, 128) if dp % t == 0)
    nt = dp // tn

    wl = jnp.pad(w_lin, ((0, pad), (0, pad)))
    wg = jnp.pad(w_gate, ((0, pad), (0, pad)))
    # Paired layout: columns [j*2*tn : (j+1)*2*tn] = [lin tile j | gate tile j],
    # so one weight BlockSpec step carries both halves of the same features.
    wl_t = wl.reshape(dp, nt, tn)
    wg_t = wg.reshape(dp, nt, tn)
    w_pair = jnp.concatenate([wl_t, wg_t], axis=-1).reshape(dp, 2 * dp)
    w_pair = w_pair.astype(jnp.bfloat16)

    g = jnp.pad(gamma.reshape(1, D), ((0, 0), (0, pad)), constant_values=1.0)
    b = jnp.pad(beta.reshape(1, D), ((0, 0), (0, pad)))

    return {"w_pair": w_pair, "gamma": g, "beta": b, "D": D, "dp": dp, "tn": tn}


def _vmem_budget_bytes(B, dp, tn):
    resident = B * dp * 2                       # bf16 LHS (kept resident)
    per_step = (dp * (2 * tn) * 2               # bf16 paired weight tile
                + B * tn * 4                    # f32 residual tile
                + 2 * tn * 4                    # gamma + beta tiles
                + B * tn * 4)                   # f32 output tile
    scratch = B * (2 * tn) * 4 * 2              # h + elementwise temporaries
    est = 2 * resident + 2 * per_step + scratch  # double-buffering headroom
    return min(int(est * 1.5) + (4 << 20), 100 << 20)


# --------------------------------------------------------------------------- #
# Forward                                                                     #
# --------------------------------------------------------------------------- #
def highway_mlp(x, params):
    """Highway MLP forward. x: [B, D] f32; params from prepare_highway_params()."""
    B, D = x.shape
    dp, tn = params["dp"], params["tn"]
    assert D == params["D"]
    pad = dp - D
    nt = dp // tn

    xp = jnp.pad(x, ((0, 0), (0, pad)))          # f32 residual, lane-dense
    xb = xp.astype(jnp.bfloat16)                 # matmul LHS, cast once per call
    # NOTE: at B=8 the bf16 LHS vreg packing / MXU rows are underfilled and the
    # fixed pallas_call overhead dominates; the real lever there is fusing this
    # layer with its neighbours, not micro-tiling.

    out = pl.pallas_call(
        highway_kernel,
        out_shape=jax.ShapeDtypeStruct((B, dp), x.dtype),
        grid=(nt,),
        in_specs=[
            pl.BlockSpec((B, dp), lambda j: (0, 0)),        # bf16 LHS, resident
            pl.BlockSpec((dp, 2 * tn), lambda j: (0, j)),   # paired weight tile
            pl.BlockSpec((B, tn), lambda j: (0, j)),        # f32 residual tile
            pl.BlockSpec((1, tn), lambda j: (0, j)),        # gamma tile
            pl.BlockSpec((1, tn), lambda j: (0, j)),        # beta tile
        ],
        out_specs=pl.BlockSpec((B, tn), lambda j: (0, j)),
        compiler_params=pltpu.CompilerParams(
            dimension_semantics=("parallel",),               # v7x: shard N over 2 TCs
            vmem_limit_bytes=_vmem_budget_bytes(B, dp, tn),
        ),
    )(xb, params["w_pair"], xp, params["gamma"], params["beta"])
    return out[:, :D]


# --------------------------------------------------------------------------- #
# References                                                                  #
# --------------------------------------------------------------------------- #
def highway_mlp_ref_f32(x, w_lin, b_lin, w_gate, b_gate, gamma, beta):
    """Exact f32 reference matching the PyTorch module (train-mode BN, eval dropout)."""
    eps = 1e-5

    def bn(h):
        mean = jnp.mean(h, axis=0, keepdims=True)
        var = jnp.mean((h - mean) ** 2, axis=0, keepdims=True)
        return (h - mean) / jnp.sqrt(var + eps) * gamma + beta

    act = jax.nn.relu(bn(x @ w_lin + b_lin))
    gate = jax.nn.sigmoid(bn(x @ w_gate + b_gate))
    return gate * act + (1.0 - gate) * x


def highway_mlp_ref_bf16(x, w_lin, w_gate, gamma, beta):
    """Reference emulating the kernel's numerics (bf16 matmul operands, f32 acc)."""
    eps = 1e-5
    xb = x.astype(jnp.bfloat16)

    def bn(h):
        mean = jnp.mean(h, axis=0, keepdims=True)
        c = h - mean
        var = jnp.mean(c * c, axis=0, keepdims=True)
        return c * jax.lax.rsqrt(var + eps) * gamma + beta

    h_lin = jnp.dot(xb, w_lin.astype(jnp.bfloat16), preferred_element_type=jnp.float32)
    h_gate = jnp.dot(xb, w_gate.astype(jnp.bfloat16), preferred_element_type=jnp.float32)
    act = jax.nn.relu(bn(h_lin))
    gate = jax.nn.sigmoid(bn(h_gate))
    return gate * act + (1.0 - gate) * x


# --------------------------------------------------------------------------- #
# Main                                                                        #
# --------------------------------------------------------------------------- #
if __name__ == "__main__":
    B, D = 8, 32   # inSize == outSize == 32 (highway requirement), batch = 8

    key = jax.random.PRNGKey(0)
    kx, kwl, kbl, kwg, kbg = jax.random.split(key, 5)

    # Deterministic init mimicking nn.Linear default: U(-1/sqrt(in), 1/sqrt(in))
    bound = 1.0 / jnp.sqrt(jnp.float32(D))
    x = jax.random.normal(kx, (B, D), dtype=jnp.float32)
    w_lin = jax.random.uniform(kwl, (D, D), jnp.float32, -bound, bound)
    b_lin = jax.random.uniform(kbl, (1, D), jnp.float32, -bound, bound)
    w_gate = jax.random.uniform(kwg, (D, D), jnp.float32, -bound, bound)
    b_gate = jax.random.uniform(kbg, (1, D), jnp.float32, -bound, bound)
    gamma = jnp.ones((1, D), jnp.float32)   # BatchNorm1d weight init
    beta = jnp.zeros((1, D), jnp.float32)   # BatchNorm1d bias init

    # Weight prep is done ONCE (hoisted out of the per-call path).
    params = prepare_highway_params(w_lin, w_gate, gamma, beta)

    out = jax.block_until_ready(highway_mlp(x, params))
    assert out.shape == (B, D) and out.dtype == jnp.float32

    # Tight check vs. a reference reproducing the kernel's bf16-operand matmul.
    ref_tight = highway_mlp_ref_bf16(x, w_lin, w_gate, gamma, beta)
    assert jnp.allclose(out, ref_tight, atol=2e-3, rtol=2e-3), \
        "mismatch vs bf16-matmul reference"

    # Semantic check vs. the exact f32 module math (biases included; they are
    # cancelled by train-mode BN).  Tolerance covers bf16 matmul rounding only.
    ref_f32 = highway_mlp_ref_f32(x, w_lin, b_lin, w_gate, b_gate, gamma, beta)
    assert jnp.allclose(out, ref_f32, atol=5e-2, rtol=5e-2), \
        "mismatch vs exact f32 module reference"

    print("KERNEL_OK")
</pallas_src>

<mosaic_0001>
module attributes {stable_mosaic.version = 11 : i64} {
  func.func @highway_kernel(%arg0: i32, %arg1: memref<8x128xbf16, #tpu.memory_space<vmem>>, %arg2: memref<128x256xbf16, #tpu.memory_space<vmem>>, %arg3: memref<8x128xf32, #tpu.memory_space<vmem>>, %arg4: memref<1x128xf32, #tpu.memory_space<vmem>>, %arg5: memref<1x128xf32, #tpu.memory_space<vmem>>, %arg6: memref<8x128xf32, #tpu.memory_space<vmem>>) attributes {dimension_semantics = [#tpu.dimension_semantics<parallel>], iteration_bounds = array<i64: 1>, scalar_prefetch = 0 : i64, scratch_operands = 0 : i64, tpu.core_type = #tpu.core_type<tc>, window_params = [{pipeline_mode = #tpu.pipeline_mode<synchronous>, transform_indices = @transform_0, window_bounds = array<i64: 8, 128>}, {transform_indices = @transform_1, window_bounds = array<i64: 128, 256>}, {transform_indices = @transform_2, window_bounds = array<i64: 8, 128>}, {transform_indices = @transform_3, window_bounds = array<i64: 1, 128>}, {transform_indices = @transform_4, window_bounds = array<i64: 1, 128>}, {transform_indices = @transform_5, window_bounds = array<i64: 8, 128>}]} {
    %c0 = arith.constant 0 : index
    %c0_0 = arith.constant 0 : index
    %0 = vector.load %arg1[%c0, %c0_0] : memref<8x128xbf16, #tpu.memory_space<vmem>>, vector<8x128xbf16>
    %c0_1 = arith.constant 0 : index
    %c0_2 = arith.constant 0 : index
    %1 = vector.load %arg2[%c0_1, %c0_2] : memref<128x256xbf16, #tpu.memory_space<vmem>>, vector<128x256xbf16>
    %cst = arith.constant dense<0.000000e+00> : vector<8x256xf32>
    %2 = tpu.matmul %0, %1, %cst {dimension_numbers = #tpu.dot_dimension_numbers<[1], [0], [0], [1], [0, 0, 1, 1], [], []>} : vector<8x128xbf16>, vector<128x256xbf16>, vector<8x256xf32> -> vector<8x256xf32>
    %cst_3 = arith.constant dense<0.000000e+00> : vector<256xf32>
    %3 = vector.multi_reduction <add>, %2, %cst_3 [0] : vector<8x256xf32> to vector<256xf32>
    %4 = vector.shape_cast %3 : vector<256xf32> to vector<1x256xf32>
    %cst_4 = arith.constant 8.000000e+00 : f32
    %5 = vector.broadcast %cst_4 : f32 to vector<1x256xf32>
    %6 = arith.divf %4, %5 : vector<1x256xf32>
    %7 = vector.broadcast %6 : vector<1x256xf32> to vector<8x256xf32>
    %8 = arith.subf %2, %7 : vector<8x256xf32>
    %9 = arith.mulf %8, %8 : vector<8x256xf32>
    %cst_5 = arith.constant dense<0.000000e+00> : vector<256xf32>
    %10 = vector.multi_reduction <add>, %9, %cst_5 [0] : vector<8x256xf32> to vector<256xf32>
    %11 = vector.shape_cast %10 : vector<256xf32> to vector<1x256xf32>
    %cst_6 = arith.constant 8.000000e+00 : f32
    %12 = vector.broadcast %cst_6 : f32 to vector<1x256xf32>
    %13 = arith.divf %11, %12 : vector<1x256xf32>
    %cst_7 = arith.constant 9.99999974E-6 : f32
    %14 = vector.broadcast %cst_7 : f32 to vector<1x256xf32>
    %15 = arith.addf %13, %14 : vector<1x256xf32>
    %16 = math.rsqrt %15 : vector<1x256xf32>
    %c0_8 = arith.constant 0 : index
    %c0_9 = arith.constant 0 : index
    %17 = vector.load %arg4[%c0_8, %c0_9] : memref<1x128xf32, #tpu.memory_space<vmem>>, vector<1x128xf32>
    %c0_10 = arith.constant 0 : index
    %c0_11 = arith.constant 0 : index
    %18 = vector.load %arg5[%c0_10, %c0_11] : memref<1x128xf32, #tpu.memory_space<vmem>>, vector<1x128xf32>
    %19 = vector.extract_strided_slice %8 {offsets = [0, 0], sizes = [8, 128], strides = [1, 1]} : vector<8x256xf32> to vector<8x128xf32>
    %20 = vector.extract_strided_slice %16 {offsets = [0, 0], sizes = [1, 128], strides = [1, 1]} : vector<1x256xf32> to vector<1x128xf32>
    %21 = vector.broadcast %20 : vector<1x128xf32> to vector<8x128xf32>
    %22 = arith.mulf %19, %21 : vector<8x128xf32>
    %23 = vector.broadcast %17 : vector<1x128xf32> to vector<8x128xf32>
    %24 = arith.mulf %22, %23 : vector<8x128xf32>
    %25 = vector.broadcast %18 : vector<1x128xf32> to vector<8x128xf32>
    %26 = arith.addf %24, %25 : vector<8x128xf32>
    %27 = vector.extract_strided_slice %8 {offsets = [0, 128], sizes = [8, 128], strides = [1, 1]} : vector<8x256xf32> to vector<8x128xf32>
    %28 = vector.extract_strided_slice %16 {offsets = [0, 128], sizes = [1, 128], strides = [1, 1]} : vector<1x256xf32> to vector<1x128xf32>
    %29 = vector.broadcast %28 : vector<1x128xf32> to vector<8x128xf32>
    %30 = arith.mulf %27, %29 : vector<8x128xf32>
    %31 = vector.broadcast %17 : vector<1x128xf32> to vector<8x128xf32>
    %32 = arith.mulf %30, %31 : vector<8x128xf32>
    %33 = vector.broadcast %18 : vector<1x128xf32> to vector<8x128xf32>
    %34 = arith.addf %32, %33 : vector<8x128xf32>
    %cst_12 = arith.constant 0.000000e+00 : f32
    %35 = vector.broadcast %cst_12 : f32 to vector<8x128xf32>
    %36 = arith.maximumf %26, %35 : vector<8x128xf32>
    %37 = arith.negf %34 : vector<8x128xf32>
    %38 = math.exp %37 : vector<8x128xf32>
    %cst_13 = arith.constant 1.000000e+00 : f32
    %39 = vector.broadcast %cst_13 : f32 to vector<8x128xf32>
    %40 = arith.addf %39, %38 : vector<8x128xf32>
    %41 = arith.divf %39, %40 : vector<8x128xf32>
    %c0_14 = arith.constant 0 : index
    %c0_15 = arith.constant 0 : index
    %42 = vector.load %arg3[%c0_14, %c0_15] : memref<8x128xf32, #tpu.memory_space<vmem>>, vector<8x128xf32>
    %43 = arith.mulf %41, %36 : vector<8x128xf32>
    %cst_16 = arith.constant 1.000000e+00 : f32
    %44 = vector.broadcast %cst_16 : f32 to vector<8x128xf32>
    %45 = arith.subf %44, %41 : vector<8x128xf32>
    %46 = arith.mulf %45, %42 : vector<8x128xf32>
    %47 = arith.addf %43, %46 : vector<8x128xf32>
    %c0_17 = arith.constant 0 : index
    %c0_18 = arith.constant 0 : index
    %48 = vector.load %arg6[%c0_17, %c0_18] : memref<8x128xf32, #tpu.memory_space<vmem>>, vector<8x128xf32>
    tpu.vector_store %arg6[%c0_17, %c0_18], %47 {strides = array<i32>} : memref<8x128xf32, #tpu.memory_space<vmem>>, vector<8x128xf32>,
    return
  }
  func.func @transform_0(%arg0: i32) -> (i32, i32) {
    %c0_i32 = arith.constant 0 : i32
    %c0_i32_0 = arith.constant 0 : i32
    %c0_i32_1 = arith.constant 0 : i32
    return %c0_i32, %c0_i32_0 : i32, i32
  }
  func.func @transform_1(%arg0: i32) -> (i32, i32) {
    %c0_i32 = arith.constant 0 : i32
    %c0_i32_0 = arith.constant 0 : i32
    return %c0_i32, %arg0 : i32, i32
  }
  func.func @transform_2(%arg0: i32) -> (i32, i32) {
    %c0_i32 = arith.constant 0 : i32
    %c0_i32_0 = arith.constant 0 : i32
    return %c0_i32, %arg0 : i32, i32
  }
  func.func @transform_3(%arg0: i32) -> (i32, i32) {
    %c0_i32 = arith.constant 0 : i32
    %c0_i32_0 = arith.constant 0 : i32
    return %c0_i32, %arg0 : i32, i32
  }
  func.func @transform_4(%arg0: i32) -> (i32, i32) {
    %c0_i32 = arith.constant 0 : i32
    %c0_i32_0 = arith.constant 0 : i32
    return %c0_i32, %arg0 : i32, i32
  }
  func.func @transform_5(%arg0: i32) -> (i32, i32) {
    %c0_i32 = arith.constant 0 : i32
    %c0_i32_0 = arith.constant 0 : i32
    return %c0_i32, %arg0 : i32, i32
  }
}

</mosaic_0001>

<llo_original>
// kernel: tpu_custom_call.1
$region0: #{tpu_custom_call.1}
  #allocation0 [shape = 'u32[]', space=smem, size = 0x4, offset = 0x4, fixed_abs, tag = 'smem constant byte address 0x4 - core index']
  #allocation1 [shape = 'u32[72,128]{1,0:T(1,128)}', space=vmem, size = 0x9000, scoped, tag = 'internal scratch']
  %s0 = inlined_call_operand.hbm [shape: bf16[8,128], index: 0, kind: input, shape index: {}]
  %s1 = inlined_call_operand.hbm [shape: bf16[128,256], index: 1, kind: input, shape index: {}]
  %s2 = inlined_call_operand.hbm [shape: f32[8,128], index: 2, kind: input, shape index: {}]
  %s3 = inlined_call_operand.vmem [shape: f32[1,128], index: 3, kind: input, shape index: {}]
  %s4 = inlined_call_operand.vmem [shape: f32[1,128], index: 4, kind: input, shape index: {}]
  %s5 = inlined_call_operand.hbm [shape: f32[8,128], index: 5, kind: output, shape index: {}]
  %s6 = sld [smem:[#allocation0]]
  $region42: #{tpu_custom_call.1} parent=0
    _
  %s8 = ssub.s32 1, %s6
  %s9 = scalar_select 0, %s8, %s6
  $region1: #{tpu_custom_call.1} parent=0
    #allocation2 [shape = 'u8[2048]{0}', space=vmem, size = 0x800, scoped, tag = 'input window, operand 0, single buffered']
    #allocation3 [shape = 's32[1]{0}', space=sflag, size = 0x4, scoped, tag = 'scoped memory for tpu_custom_call.1']
    #allocation4 [shape = 's32[1]{0}', space=sflag, size = 0x4, scoped, tag = 'scoped memory for tpu_custom_call.1']
    #allocation5 [shape = 'u8[65536]{0}', space=vmem, size = 0x10000, scoped, tag = 'input window, operand 1, single buffered']
    #allocation6 [shape = 's32[1]{0}', space=sflag, size = 0x4, scoped, tag = 'scoped memory for tpu_custom_call.1']
    #allocation7 [shape = 'u8[4096]{0}', space=vmem, size = 0x1000, scoped, tag = 'input window, operand 2, single buffered']
    #allocation8 [shape = 'u8[4096]{0}', space=vmem, size = 0x1000, scoped, tag = 'output window, operand 0, single buffered']
    %10 = vsyncpa [#allocation3], 0
    %11 = vsyncpa [#allocation6], 0
    %12 = vsyncpa [#allocation4], 0
    // Predicated region
    $region2: #{tpu_custom_call.1} parent=1 // pred_check
      _
    $region3: #{tpu_custom_call.1} parent=1 // pred_check_branch
      %14 = sbr.rel (0) target = $region5
    $region4: #{tpu_custom_call.1} parent=1 // pred_region
      %16 = vsyncadd [#allocation3], 0
      %s18 = sshll.u32 %s0, 4
      %s19 = int_to_ptr.hbm [resolvable:$true] %s18
      %s20 = sshll.u32 [#allocation2], 4
      %s21 = int_to_ptr.vmem [resolvable:$true] %s20
      %23 = dma.hbm_to_vmem [thread:$0]  %s19, 64, %s21, [#allocation3]
    $region5: #{tpu_custom_call.1} parent=1 // pred_fallthru
      _
    // Predicated region
    $region6: #{tpu_custom_call.1} parent=1 // pred_check
      _
    $region7: #{tpu_custom_call.1} parent=1 // pred_check_branch
      %25 = sbr.rel (0) target = $region9
    $region8: #{tpu_custom_call.1} parent=1 // pred_region
      %27 = vsyncadd [#allocation6], 0
      %s28 = sshll.u32 %s1, 4
      %s29 = int_to_ptr.hbm [resolvable:$true] %s28
      %s30 = sshll.u32 [#allocation5], 4
      %s31 = int_to_ptr.vmem [resolvable:$true] %s30
      %36 = dma.hbm_to_vmem [thread:$0]  %s29, 2048, %s31, [#allocation6], 128, 128, 8
    $region9: #{tpu_custom_call.1} parent=1 // pred_fallthru
      _
    // Predicated region
    $region10: #{tpu_custom_call.1} parent=1 // pred_check
      _
    $region11: #{tpu_custom_call.1} parent=1 // pred_check_branch
      %38 = sbr.rel (0) target = $region13
    $region12: #{tpu_custom_call.1} parent=1 // pred_region
      %40 = vsyncadd [#allocation6], 0
      %s42 = sshll.u32 %s2, 4
      %s43 = int_to_ptr.hbm [resolvable:$true] %s42
      %s44 = sshll.u32 [#allocation7], 4
      %s45 = int_to_ptr.vmem [resolvable:$true] %s44
      %47 = dma.hbm_to_vmem [thread:$0]  %s43, 128, %s45, [#allocation6]
    $region13: #{tpu_custom_call.1} parent=1 // pred_fallthru
      _
    // Predicated region
    $region14: #{tpu_custom_call.1} parent=1 // pred_check
      _
    $region15: #{tpu_custom_call.1} parent=1 // pred_check_branch
      %49 = sbr.rel (0) target = $region17
    $region16: #{tpu_custom_call.1} parent=1 // pred_region
      _
    $region17: #{tpu_custom_call.1} parent=1 // pred_fallthru
      _
    // Predicated region
    $region18: #{tpu_custom_call.1} parent=1 // pred_check
      _
    $region19: #{tpu_custom_call.1} parent=1 // pred_check_branch
      %51 = sbr.rel (0) target = $region21
    $region20: #{tpu_custom_call.1} parent=1 // pred_region
      _
    $region21: #{tpu_custom_call.1} parent=1 // pred_fallthru
      _
    // Predicated region
    $region22: #{tpu_custom_call.1} parent=1 // pred_check
      _
    $region23: #{tpu_custom_call.1} parent=1 // pred_check_branch
      %53 = sbr.rel (0) target = $region25
    $region24: #{tpu_custom_call.1} parent=1 // pred_region
      %55 = dma.done [#allocation3], 64
    $region25: #{tpu_custom_call.1} parent=1 // pred_fallthru
      _
    // Predicated region
    $region26: #{tpu_custom_call.1} parent=1 // pred_check
      _
    $region27: #{tpu_custom_call.1} parent=1 // pred_check_branch
      %57 = sbr.rel (0) target = $region29
    $region28: #{tpu_custom_call.1} parent=1 // pred_region
      %59 = dma.done [#allocation6], 2048
    $region29: #{tpu_custom_call.1} parent=1 // pred_fallthru
      _
    // Predicated region
    $region30: #{tpu_custom_call.1} parent=1 // pred_check
      _
    $region31: #{tpu_custom_call.1} parent=1 // pred_check_branch
      %61 = sbr.rel (0) target = $region33
    $region32: #{tpu_custom_call.1} parent=1 // pred_region
      %63 = dma.done [#allocation6], 128
    $region33: #{tpu_custom_call.1} parent=1 // pred_fallthru
      _
    %v64 = vld [vmem:[#allocation2] sm:$0xf]
    %v65 = vld [vmem:[#allocation5] sm:$0xff]
    %v66 = vld [vmem:[#allocation5 + $0x8] sm:$0xff]
    %v67 = vld [vmem:[#allocation5 + $0x10] sm:$0xff]
    %v68 = vld [vmem:[#allocation5 + $0x18] sm:$0xff]
    %v69 = vld [vmem:[#allocation5 + $0x20] sm:$0xff]
    %v70 = vld [vmem:[#allocation5 + $0x28] sm:$0xff]
    %v71 = vld [vmem:[#allocation5 + $0x30] sm:$0xff]
    %v72 = vld [vmem:[#allocation5 + $0x38] sm:$0xff]
    %v73 = vld [vmem:[#allocation5 + $0x40] sm:$0xff]
    %v74 = vld [vmem:[#allocation5 + $0x48] sm:$0xff]
    %v75 = vld [vmem:[#allocation5 + $0x50] sm:$0xff]
    %v76 = vld [vmem:[#allocation5 + $0x58] sm:$0xff]
    %v77 = vld [vmem:[#allocation5 + $0x60] sm:$0xff]
    %v78 = vld [vmem:[#allocation5 + $0x68] sm:$0xff]
    %v79 = vld [vmem:[#allocation5 + $0x70] sm:$0xff]
    %v80 = vld [vmem:[#allocation5 + $0x78] sm:$0xff]
    %v97 = vunpack.c.l.b16 %v65
    %v98 = vunpack.c.h.b16 %v65
    %v99 = vunpack.c.l.b16 %v66
    %v100 = vunpack.c.h.b16 %v66
    %v101 = vunpack.c.l.b16 %v67
    %v102 = vunpack.c.h.b16 %v67
    %v103 = vunpack.c.l.b16 %v68
    %v104 = vunpack.c.h.b16 %v68
    %v105 = vunpack.c.l.b16 %v69
    %v106 = vunpack.c.h.b16 %v69
    %v107 = vunpack.c.l.b16 %v70
    %v108 = vunpack.c.h.b16 %v70
    %v109 = vunpack.c.l.b16 %v71
    %v110 = vunpack.c.h.b16 %v71
    %v111 = vunpack.c.l.b16 %v72
    %v112 = vunpack.c.h.b16 %v72
    %v113 = vunpack.c.l.b16 %v73
    %v114 = vunpack.c.h.b16 %v73
    %v115 = vunpack.c.l.b16 %v74
    %v116 = vunpack.c.h.b16 %v74
    %v117 = vunpack.c.l.b16 %v75
    %v118 = vunpack.c.h.b16 %v75
    %v119 = vunpack.c.l.b16 %v76
    %v120 = vunpack.c.h.b16 %v76
    %v121 = vunpack.c.l.b16 %v77
    %v122 = vunpack.c.h.b16 %v77
    %v123 = vunpack.c.l.b16 %v78
    %v124 = vunpack.c.h.b16 %v78
    %v125 = vunpack.c.l.b16 %v79
    %v126 = vunpack.c.h.b16 %v79
    %v127 = vunpack.c.l.b16 %v80
    %v128 = vunpack.c.h.b16 %v80
    %v129 = vpack.c.b16 %v99, %v97
    %v130 = vpack.c.b16 %v100, %v98
    %v131 = vpack.c.b16 %v103, %v101
    %v132 = vpack.c.b16 %v104, %v102
    %v133 = vpack.c.b16 %v107, %v105
    %v134 = vpack.c.b16 %v108, %v106
    %v135 = vpack.c.b16 %v111, %v109
    %v136 = vpack.c.b16 %v112, %v110
    %v137 = vpack.c.b16 %v115, %v113
    %v138 = vpack.c.b16 %v116, %v114
    %v139 = vpack.c.b16 %v119, %v117
    %v140 = vpack.c.b16 %v120, %v118
    %v141 = vpack.c.b16 %v123, %v121
    %v142 = vpack.c.b16 %v124, %v122
    %v143 = vpack.c.b16 %v127, %v125
    %v144 = vpack.c.b16 %v128, %v126
    %161 = vmatpush.bf16.msra.mxu0 %v143
    %162 = vmatpush.bf16.msra.mxu0 %v141
    %163 = vmatpush.bf16.msra.mxu0 %v139
    %164 = vmatpush.bf16.msra.mxu0 %v137
    %165 = vmatpush.bf16.msra.mxu0 %v135
    %166 = vmatpush.bf16.msra.mxu0 %v133
    %167 = vmatpush.bf16.msra.mxu0 %v131
    %168 = vmatpush.bf16.msra.mxu0 %v129
    %169 = vmatmul.bf16.gmra.mxu0 %v64
    %v170 = vpop.f32.mrf.mxu0
    %v171 = vadd.f32 0.0, %v170
    %v172 = vpop.f32.mrf.mxu0
    %173 = vdwg.mxu0
    %174 = vmatpush.bf16.msra.mxu0 %v144
    %175 = vmatpush.bf16.msra.mxu0 %v142
    %176 = vmatpush.bf16.msra.mxu0 %v140
    %177 = vmatpush.bf16.msra.mxu0 %v138
    %178 = vmatpush.bf16.msra.mxu0 %v136
    %179 = vmatpush.bf16.msra.mxu0 %v134
    %180 = vmatpush.bf16.msra.mxu0 %v132
    %181 = vmatpush.bf16.msra.mxu0 %v130
    %182 = vmatmul.bf16.gmra.mxu0 %v64
    %v183 = vpop.f32.mrf.mxu0
    %v184 = vadd.f32 0.0, %v183
    %v185 = vpop.f32.mrf.mxu0
    %186 = vdwg.mxu0
    %v187 = vrot.slane %v171, 4
    %v188 = vadd.f32 %v171, %v187
    %v189 = vrot.slane %v188, 2
    %v190 = vadd.f32 %v188, %v189
    %v191 = vrot.slane %v190, 1
    %v192 = vadd.f32 %v190, %v191
    %v193 = vrot.slane %v184, 4
    %v194 = vadd.f32 %v184, %v193
    %v195 = vrot.slane %v194, 2
    %v196 = vadd.f32 %v194, %v195
    %v197 = vrot.slane %v196, 1
    %v198 = vadd.f32 %v196, %v197
    %v199 = vrcp.pop 8.0
    %v200 = vmul.f32 8.0, %v199
    %v201 = vsub.f32 1.0, %v200
    %v202 = vmul.f32 %v199, %v201
    %v203 = vadd.f32 %v199, %v202
    %vm204 = vweird.f32 %v199
    %v205 = vsel %vm204, %v199, %v203
    %v206 = vmul.f32 %v192, %v205
    %v207 = vmul.f32 %v198, %v205
    %v208 = vsub.f32 %v171, %v206
    %v209 = vsub.f32 %v184, %v207
    %v210 = vmul.f32 %v208, %v208
    %v211 = vmul.f32 %v209, %v209
    %v212 = vrot.slane %v210, 4
    %v213 = vadd.f32 %v210, %v212
    %v214 = vrot.slane %v213, 2
    %v215 = vadd.f32 %v213, %v214
    %v216 = vrot.slane %v215, 1
    %v217 = vadd.f32 %v215, %v216
    %v218 = vrot.slane %v211, 4
    %v219 = vadd.f32 %v211, %v218
    %v220 = vrot.slane %v219, 2
    %v221 = vadd.f32 %v219, %v220
    %v222 = vrot.slane %v221, 1
    %v223 = vadd.f32 %v221, %v222
    %v224 = vmul.f32 %v217, %v205
    %v225 = vmul.f32 %v223, %v205
    %v226 = vadd.f32 %v224, 1e-05
    %v227 = vadd.f32 %v225, 1e-05
    %v228 = vrsqrt.pop %v226
    %v229 = vmul.f32 %v228, %v226
    %v230 = vmul.f32 %v229, %v228
    %v231 = vmul.f32 0.5, %v230
    %v232 = vsub.f32 1.5, %v231
    %v233 = vmul.f32 %v228, %v232
    %vm234 = vweird.f32 %v226
    %vm235 = vweird.f32 %v228
    %vm236 = vmor %vm234, %vm235
    %v237 = vsel %vm236, %v228, %v233
    %v238 = vrsqrt.pop %v227
    %v239 = vmul.f32 %v238, %v227
    %v240 = vmul.f32 %v239, %v238
    %v241 = vmul.f32 0.5, %v240
    %v242 = vsub.f32 1.5, %v241
    %v243 = vmul.f32 %v238, %v242
    %vm244 = vweird.f32 %v227
    %vm245 = vweird.f32 %v238
    %vm246 = vmor %vm244, %vm245
    %v247 = vsel %vm246, %v238, %v243
    %v248 = vld [vmem:[%s3] sm:$0x1]
    %v249 = vld [vmem:[%s4] sm:$0x1]
    %v250 = vmul.f32 %v208, %v237
    %v252 = vperm.slane %v248, 0
    %v254 = vmul.f32 %v250, %v252
    %v256 = vperm.slane %v249, 0
    %v258 = vadd.f32 %v254, %v256
    %v259 = vmul.f32 %v209, %v247
    %v260 = vmul.f32 %v259, %v252
    %v261 = vadd.f32 %v260, %v256
    %v262 = vmax.f32 %v258, 0.0
    %v263 = vxor.u32 %v261, 2147483648
    %v264 = vmul.f32 %v263, 1.442695
    %v265 = vpow.pop %v264
    %v266 = vadd.f32 %v265, 1.0
    %v267 = vrcp.pop %v266
    %v268 = vmul.f32 %v266, %v267
    %v269 = vsub.f32 1.0, %v268
    %v270 = vmul.f32 %v267, %v269
    %v271 = vadd.f32 %v267, %v270
    %vm272 = vweird.f32 %v266
    %vm273 = vweird.f32 %v267
    %vm274 = vmor %vm272, %vm273
    %v275 = vsel %vm274, %v267, %v271
    %v276 = vand.u32 2147483647, %v266
    %vm277 = vcmp.eq.f32.partialorder %v276, 8.507059e+37
    %v278 = vand.u32 %v266, 2147483648
    %v279 = vor.u32 1.1754944e-38, %v278
    %v280 = vsel %vm277, %v279, %v275
    %v281 = vmul.f32 1.0, %v280
    %v282 = vld [vmem:[#allocation7] sm:$0xff]
    %v283 = vmul.f32 %v281, %v262
    %v284 = vsub.f32 1.0, %v281
    %v285 = vmul.f32 %v284, %v282
    %v286 = vadd.f32 %v283, %v285
    %287 = vst [vmem:[#allocation8] sm:$0xff] %v286
    // Predicated region
    $region34: #{tpu_custom_call.1} parent=1 // pred_check
      _
    $region35: #{tpu_custom_call.1} parent=1 // pred_check_branch
      %289 = sbr.rel (0) target = $region37
    $region36: #{tpu_custom_call.1} parent=1 // pred_region
      %291 = vsyncadd [#allocation4], 0
      %s293 = sshll.u32 [#allocation8], 4
      %s294 = int_to_ptr.vmem [resolvable:$true] %s293
      %s295 = sshll.u32 %s5, 4
      %s296 = int_to_ptr.hbm [resolvable:$true] %s295
      %298 = dma.vmem_to_hbm [thread:$0]  %s294, 128, %s296, [#allocation4]
    $region37: #{tpu_custom_call.1} parent=1 // pred_fallthru
      _
    // Predicated region
    $region38: #{tpu_custom_call.1} parent=1 // pred_check
      _
    $region39: #{tpu_custom_call.1} parent=1 // pred_check_branch
      %300 = sbr.rel (0) target = $region41
    $region40: #{tpu_custom_call.1} parent=1 // pred_region
      %302 = dma.done [#allocation4], 128
    $region41: #{tpu_custom_call.1} parent=1 // pred_fallthru
      _
    %303 = vsyncpa [#allocation3], 1
    %304 = vsyncpa [#allocation6], 1
    %305 = vsyncpa [#allocation4], 1

</llo_original>
